<compile_context>
chip_gen: v7x
topology: tpu7x:2x2x1
jax: 0.10.0
libtpu: 0.0.40
codegen_flags: <defaults>
</compile_context>

<pallas_src>
import functools

import jax
import jax.numpy as jnp
from jax.experimental import pallas as pl
from jax.experimental.pallas import tpu as pltpu


def _round_up(n, m):
    return (n + m - 1) // m * m


def _policy_kernel(x_ref, cmd_ref,
                   w1_ref, b1_ref, w2_ref, b2_ref,
                   wh_ref, bh_ref,
                   out_ref, *, nb_actions):
    na = nb_actions
    g = 2 * na
    x = x_ref[...]                      # bf16 (TB, obs_dim)

    # fc1 -> relu, fc2 -> relu. bf16 operands, f32 MXU accumulation.
    h1 = jnp.dot(x, w1_ref[...], preferred_element_type=jnp.float32) + b1_ref[...]
    h1 = jnp.maximum(h1, 0.0).astype(jnp.bfloat16)
    h2 = jnp.dot(h1, w2_ref[...], preferred_element_type=jnp.float32) + b2_ref[...]
    h2 = jnp.maximum(h2, 0.0).astype(jnp.bfloat16)

    # All six heads fused into a single matmul.
    # Column layout: [mu_L|ls_L | mu_S|ls_S | mu_R|ls_R]  (groups of width 2*na)
    heads = jnp.dot(h2, wh_ref[...], preferred_element_type=jnp.float32) + bh_ref[...]

    cmd = cmd_ref[...]                  # (TB, 1) int32; broadcasts over lanes
    is_left = cmd == 0                  # hoisted, reused
    is_straight = cmd == 1

    left = heads[:, 0:g]
    straight = heads[:, g:2 * g]
    right = heads[:, 2 * g:3 * g]
    sel = jnp.where(is_left, left, jnp.where(is_straight, straight, right))

    mu = sel[:, :na]                                        # torch.gather(mu, ...)
    std = jnp.exp(jnp.clip(sel[:, na:], -20.0, 2.0))        # clamp + exp
    out_ref[...] = jnp.concatenate([mu, std], axis=-1)      # (TB, 2*na)


def _choose_tiles(B, block_b):
    """Balanced batch tiles; >=2 (even) tiles for large B so v7x uses both TCs."""
    n_tiles = max(1, pl.cdiv(B, block_b))
    if B >= 1024:
        n_tiles = max(n_tiles, 2)
        if n_tiles % 2:
            n_tiles += 1
    tb = _round_up(pl.cdiv(B, n_tiles), 8)
    return tb, n_tiles


def policy_forward(x, command, params, *, block_b=2048):
    """PolicyNetwork forward. Returns (mu, std), each (B, nb_actions) float32."""
    B, obs_dim = x.shape
    hidden = params["w1"].shape[-1]
    na = params["w_heads"].shape[-1] // 6

    tb, n_tiles = _choose_tiles(B, block_b)
    pB = tb * n_tiles

    # bf16 activation / weight path (f32 accumulation inside the kernel).
    x = x.astype(jnp.bfloat16)
    if pB != B:
        x = jnp.pad(x, ((0, pB - B), (0, 0)))
        command = jnp.pad(command, ((0, pB - B), (0, 0)))   # padded rows -> cmd 0
    w1 = params["w1"].astype(jnp.bfloat16)
    w2 = params["w2"].astype(jnp.bfloat16)
    wh = params["w_heads"].astype(jnp.bfloat16)
    b1, b2, bh = params["b1"], params["b2"], params["b_heads"]

    grid = (n_tiles,)
    batch_map = lambda i: (i, 0)
    resident_map = lambda i: (0, 0)     # same block every step -> stays in VMEM

    out_w = 2 * na
    flops = 2 * pB * (obs_dim * hidden + hidden * hidden + hidden * 6 * na)
    weight_bytes = 2 * (obs_dim * hidden + hidden * hidden + hidden * 6 * na)
    bias_bytes = 4 * (hidden + hidden + 6 * na)
    bytes_accessed = (pB * (2 * obs_dim + 4 + 4 * out_w)
                      + weight_bytes + bias_bytes)

    # Raise the scoped-VMEM limit only when huge tiles would exceed v5e's
    # 16 MiB default (weights + double-buffered x/cmd/out + f32 temporaries).
    per_tile_io = tb * (2 * obs_dim + 4 + 4 * out_w)
    tmp_bytes = tb * (2 * hidden + 6 * na) * 4
    vmem_est = 2 * per_tile_io + 2 * (weight_bytes + bias_bytes) + tmp_bytes + (1 << 20)
    vmem_limit = None
    if vmem_est > 12 * (1 << 20):
        vmem_limit = min(int(vmem_est * 2), 96 * (1 << 20))

    out = pl.pallas_call(
        functools.partial(_policy_kernel, nb_actions=na),
        out_shape=jax.ShapeDtypeStruct((pB, out_w), jnp.float32),
        grid=grid,
        in_specs=[
            pl.BlockSpec((tb, obs_dim), batch_map),
            pl.BlockSpec((tb, 1), batch_map),
            pl.BlockSpec(w1.shape, resident_map),
            pl.BlockSpec(b1.shape, resident_map),
            pl.BlockSpec(w2.shape, resident_map),
            pl.BlockSpec(b2.shape, resident_map),
            pl.BlockSpec(wh.shape, resident_map),
            pl.BlockSpec(bh.shape, resident_map),
        ],
        out_specs=pl.BlockSpec((tb, out_w), batch_map),
        compiler_params=pltpu.CompilerParams(
            dimension_semantics=("parallel",),
            vmem_limit_bytes=vmem_limit),
        cost_estimate=pl.CostEstimate(
            flops=flops, transcendentals=pB * na, bytes_accessed=bytes_accessed),
    )(x, command, w1, b1, w2, b2, wh, bh)

    mu = out[:B, :na]
    std = out[:B, na:]
    return mu, std


# ---------------- deterministic parameter init (mirrors nn.Linear inits) ---- #

def _he_normal(key, fan_in, fan_out):
    # kaiming_normal_ default: std = sqrt(2 / fan_in); stored as (in, out).
    std = jnp.sqrt(2.0 / fan_in)
    return jax.random.normal(key, (fan_in, fan_out), jnp.float32) * std


def _xavier_uniform(key, fan_in, fan_out):
    bound = jnp.sqrt(6.0 / (fan_in + fan_out))
    return jax.random.uniform(key, (fan_in, fan_out), jnp.float32, -bound, bound)


def _bias(key, fan_in, fan_out):
    # PyTorch Linear default bias: U(-1/sqrt(fan_in), 1/sqrt(fan_in)); kept (1, out).
    bound = 1.0 / jnp.sqrt(fan_in)
    return jax.random.uniform(key, (1, fan_out), jnp.float32, -bound, bound)


def make_params(key, obs_dim, nb_actions=2, hidden=64):
    ks = jax.random.split(key, 16)
    w1 = _he_normal(ks[0], obs_dim, hidden)
    b1 = _bias(ks[1], obs_dim, hidden)
    w2 = _he_normal(ks[2], hidden, hidden)
    b2 = _bias(ks[3], hidden, hidden)
    # Fused head weight, grouped per command: [mu_L|ls_L | mu_S|ls_S | mu_R|ls_R]
    mu_w = [_xavier_uniform(ks[4 + i], hidden, nb_actions) for i in range(3)]
    ls_w = [_xavier_uniform(ks[10 + i], hidden, nb_actions) for i in range(3)]
    mu_b = [_bias(ks[7 + i], hidden, nb_actions) for i in range(3)]
    ls_b = [_bias(ks[13 + i], hidden, nb_actions) for i in range(3)]
    w_heads = jnp.concatenate(
        [mu_w[0], ls_w[0], mu_w[1], ls_w[1], mu_w[2], ls_w[2]], axis=1)
    b_heads = jnp.concatenate(
        [mu_b[0], ls_b[0], mu_b[1], ls_b[1], mu_b[2], ls_b[2]], axis=1)
    return dict(w1=w1, b1=b1, w2=w2, b2=b2, w_heads=w_heads, b_heads=b_heads)


# ---------------- pure-JAX reference for verification ---------------------- #
# Mirrors the kernel's bf16-operand / f32-accumulation math so the comparison
# is tight.  (The torch module is f32 end-to-end; bf16 on the MXU is the
# standard TPU trade-off and differs from f32 only at the ~1e-2 level.)

def policy_forward_ref(x, command, params):
    na = params["w_heads"].shape[-1] // 6
    g = 2 * na
    xb = x.astype(jnp.bfloat16)
    w1 = params["w1"].astype(jnp.bfloat16)
    w2 = params["w2"].astype(jnp.bfloat16)
    wh = params["w_heads"].astype(jnp.bfloat16)
    h1 = jnp.dot(xb, w1, preferred_element_type=jnp.float32) + params["b1"]
    h1 = jnp.maximum(h1, 0.0).astype(jnp.bfloat16)
    h2 = jnp.dot(h1, w2, preferred_element_type=jnp.float32) + params["b2"]
    h2 = jnp.maximum(h2, 0.0).astype(jnp.bfloat16)
    heads = jnp.dot(h2, wh, preferred_element_type=jnp.float32) + params["b_heads"]
    groups = jnp.stack([heads[:, 0:g], heads[:, g:2 * g], heads[:, 2 * g:3 * g]], 0)
    idx = command[:, 0]
    sel = jnp.take_along_axis(groups, idx[None, :, None], axis=0)[0]
    mu = sel[:, :na]
    std = jnp.exp(jnp.clip(sel[:, na:], -20.0, 2.0))
    return mu, std


if __name__ == "__main__":
    key = jax.random.PRNGKey(0)
    k_param, k_x, k_cmd = jax.random.split(key, 3)

    B, obs_dim, nb_actions = 8, 32, 2
    params = make_params(k_param, obs_dim, nb_actions)
    x = jax.random.normal(k_x, (B, obs_dim), jnp.float32)
    command = jax.random.randint(k_cmd, (B, 1), 0, 3, jnp.int32)

    mu, std = policy_forward(x, command, params)
    jax.block_until_ready((mu, std))

    mu_ref, std_ref = policy_forward_ref(x, command, params)
    assert mu.shape == (B, nb_actions) and std.shape == (B, nb_actions)
    assert jnp.allclose(mu, mu_ref, atol=1e-3, rtol=1e-3), "mu mismatch"
    assert jnp.allclose(std, std_ref, atol=1e-3, rtol=1e-3), "std mismatch"

    print("KERNEL_OK")
</pallas_src>

<mosaic_0001>
module attributes {stable_mosaic.version = 11 : i64} {
  func.func @_policy_kernel(%arg0: i32, %arg1: memref<8x32xbf16, #tpu.memory_space<vmem>>, %arg2: memref<8x1xi32, #tpu.memory_space<vmem>>, %arg3: memref<32x64xbf16, #tpu.memory_space<vmem>>, %arg4: memref<1x64xf32, #tpu.memory_space<vmem>>, %arg5: memref<64x64xbf16, #tpu.memory_space<vmem>>, %arg6: memref<1x64xf32, #tpu.memory_space<vmem>>, %arg7: memref<64x12xbf16, #tpu.memory_space<vmem>>, %arg8: memref<1x12xf32, #tpu.memory_space<vmem>>, %arg9: memref<8x4xf32, #tpu.memory_space<vmem>>) attributes {dimension_semantics = [#tpu.dimension_semantics<parallel>], iteration_bounds = array<i64: 1>, scalar_prefetch = 0 : i64, scratch_operands = 0 : i64, tpu.core_type = #tpu.core_type<tc>, window_params = [{transform_indices = @transform_0, window_bounds = array<i64: 8, 32>}, {transform_indices = @transform_1, window_bounds = array<i64: 8, 1>}, {pipeline_mode = #tpu.pipeline_mode<synchronous>, transform_indices = @transform_2, window_bounds = array<i64: 32, 64>}, {pipeline_mode = #tpu.pipeline_mode<synchronous>, transform_indices = @transform_3, window_bounds = array<i64: 1, 64>}, {pipeline_mode = #tpu.pipeline_mode<synchronous>, transform_indices = @transform_4, window_bounds = array<i64: 64, 64>}, {pipeline_mode = #tpu.pipeline_mode<synchronous>, transform_indices = @transform_5, window_bounds = array<i64: 1, 64>}, {pipeline_mode = #tpu.pipeline_mode<synchronous>, transform_indices = @transform_6, window_bounds = array<i64: 64, 12>}, {pipeline_mode = #tpu.pipeline_mode<synchronous>, transform_indices = @transform_7, window_bounds = array<i64: 1, 12>}, {transform_indices = @transform_8, window_bounds = array<i64: 8, 4>}]} {
    %c0 = arith.constant 0 : index
    %c0_0 = arith.constant 0 : index
    %0 = vector.load %arg1[%c0, %c0_0] : memref<8x32xbf16, #tpu.memory_space<vmem>>, vector<8x32xbf16>
    %c0_1 = arith.constant 0 : index
    %c0_2 = arith.constant 0 : index
    %1 = vector.load %arg3[%c0_1, %c0_2] : memref<32x64xbf16, #tpu.memory_space<vmem>>, vector<32x64xbf16>
    %cst = arith.constant dense<0.000000e+00> : vector<8x64xf32>
    %2 = tpu.matmul %0, %1, %cst {dimension_numbers = #tpu.dot_dimension_numbers<[1], [0], [0], [1], [0, 0, 1, 1], [], []>} : vector<8x32xbf16>, vector<32x64xbf16>, vector<8x64xf32> -> vector<8x64xf32>
    %c0_3 = arith.constant 0 : index
    %c0_4 = arith.constant 0 : index
    %3 = vector.load %arg4[%c0_3, %c0_4] : memref<1x64xf32, #tpu.memory_space<vmem>>, vector<1x64xf32>
    %4 = vector.broadcast %3 : vector<1x64xf32> to vector<8x64xf32>
    %5 = arith.addf %2, %4 : vector<8x64xf32>
    %cst_5 = arith.constant 0.000000e+00 : f32
    %6 = vector.broadcast %cst_5 : f32 to vector<8x64xf32>
    %7 = arith.maximumf %5, %6 : vector<8x64xf32>
    %8 = arith.truncf %7 : vector<8x64xf32> to vector<8x64xbf16>
    %c0_6 = arith.constant 0 : index
    %c0_7 = arith.constant 0 : index
    %9 = vector.load %arg5[%c0_6, %c0_7] : memref<64x64xbf16, #tpu.memory_space<vmem>>, vector<64x64xbf16>
    %cst_8 = arith.constant dense<0.000000e+00> : vector<8x64xf32>
    %10 = tpu.matmul %8, %9, %cst_8 {dimension_numbers = #tpu.dot_dimension_numbers<[1], [0], [0], [1], [0, 0, 1, 1], [], []>} : vector<8x64xbf16>, vector<64x64xbf16>, vector<8x64xf32> -> vector<8x64xf32>
    %c0_9 = arith.constant 0 : index
    %c0_10 = arith.constant 0 : index
    %11 = vector.load %arg6[%c0_9, %c0_10] : memref<1x64xf32, #tpu.memory_space<vmem>>, vector<1x64xf32>
    %12 = vector.broadcast %11 : vector<1x64xf32> to vector<8x64xf32>
    %13 = arith.addf %10, %12 : vector<8x64xf32>
    %cst_11 = arith.constant 0.000000e+00 : f32
    %14 = vector.broadcast %cst_11 : f32 to vector<8x64xf32>
    %15 = arith.maximumf %13, %14 : vector<8x64xf32>
    %16 = arith.truncf %15 : vector<8x64xf32> to vector<8x64xbf16>
    %c0_12 = arith.constant 0 : index
    %c0_13 = arith.constant 0 : index
    %17 = vector.load %arg7[%c0_12, %c0_13] : memref<64x12xbf16, #tpu.memory_space<vmem>>, vector<64x12xbf16>
    %cst_14 = arith.constant dense<0.000000e+00> : vector<8x12xf32>
    %18 = tpu.matmul %16, %17, %cst_14 {dimension_numbers = #tpu.dot_dimension_numbers<[1], [0], [0], [1], [0, 0, 1, 1], [], []>} : vector<8x64xbf16>, vector<64x12xbf16>, vector<8x12xf32> -> vector<8x12xf32>
    %c0_15 = arith.constant 0 : index
    %c0_16 = arith.constant 0 : index
    %19 = vector.load %arg8[%c0_15, %c0_16] : memref<1x12xf32, #tpu.memory_space<vmem>>, vector<1x12xf32>
    %20 = vector.broadcast %19 : vector<1x12xf32> to vector<8x12xf32>
    %21 = arith.addf %18, %20 : vector<8x12xf32>
    %c0_17 = arith.constant 0 : index
    %c0_18 = arith.constant 0 : index
    %22 = vector.load %arg2[%c0_17, %c0_18] : memref<8x1xi32, #tpu.memory_space<vmem>>, vector<8x1xi32>
    %c0_i32 = arith.constant 0 : i32
    %23 = vector.broadcast %c0_i32 : i32 to vector<8x1xi32>
    %24 = arith.cmpi eq, %22, %23 : vector<8x1xi32>
    %c1_i32 = arith.constant 1 : i32
    %25 = vector.broadcast %c1_i32 : i32 to vector<8x1xi32>
    %26 = arith.cmpi eq, %22, %25 : vector<8x1xi32>
    %27 = vector.extract_strided_slice %21 {offsets = [0, 0], sizes = [8, 4], strides = [1, 1]} : vector<8x12xf32> to vector<8x4xf32>
    %28 = vector.extract_strided_slice %21 {offsets = [0, 4], sizes = [8, 4], strides = [1, 1]} : vector<8x12xf32> to vector<8x4xf32>
    %29 = vector.extract_strided_slice %21 {offsets = [0, 8], sizes = [8, 4], strides = [1, 1]} : vector<8x12xf32> to vector<8x4xf32>
    %30 = vector.shape_cast %26 : vector<8x1xi1> to vector<8x1xi1>
    %31 = vector.broadcast %30 : vector<8x1xi1> to vector<8x4xi1>
    %32 = arith.select %31, %28, %29 : vector<8x4xi1>, vector<8x4xf32>
    %33 = vector.shape_cast %24 : vector<8x1xi1> to vector<8x1xi1>
    %34 = vector.broadcast %33 : vector<8x1xi1> to vector<8x4xi1>
    %35 = arith.select %34, %27, %32 : vector<8x4xi1>, vector<8x4xf32>
    %36 = vector.extract_strided_slice %35 {offsets = [0, 0], sizes = [8, 2], strides = [1, 1]} : vector<8x4xf32> to vector<8x2xf32>
    %37 = vector.extract_strided_slice %35 {offsets = [0, 2], sizes = [8, 2], strides = [1, 1]} : vector<8x4xf32> to vector<8x2xf32>
    %cst_19 = arith.constant -2.000000e+01 : f32
    %cst_20 = arith.constant 2.000000e+00 : f32
    %38 = vector.broadcast %cst_19 : f32 to vector<8x2xf32>
    %39 = arith.maximumf %38, %37 : vector<8x2xf32>
    %40 = vector.broadcast %cst_20 : f32 to vector<8x2xf32>
    %41 = arith.minimumf %40, %39 : vector<8x2xf32>
    %42 = math.exp %41 : vector<8x2xf32>
    %43 = tpu.concatenate %36, %42 in 1 : vector<8x2xf32>, vector<8x2xf32> -> vector<8x4xf32>
    %c0_21 = arith.constant 0 : index
    %c0_22 = arith.constant 0 : index
    %44 = vector.load %arg9[%c0_21, %c0_22] : memref<8x4xf32, #tpu.memory_space<vmem>>, vector<8x4xf32>
    tpu.vector_store %arg9[%c0_21, %c0_22], %43 {strides = array<i32>} : memref<8x4xf32, #tpu.memory_space<vmem>>, vector<8x4xf32>,
    return
  }
  func.func @transform_0(%arg0: i32) -> (i32, i32) {
    %c0_i32 = arith.constant 0 : i32
    %c0_i32_0 = arith.constant 0 : i32
    return %arg0, %c0_i32 : i32, i32
  }
  func.func @transform_1(%arg0: i32) -> (i32, i32) {
    %c0_i32 = arith.constant 0 : i32
    %c0_i32_0 = arith.constant 0 : i32
    return %arg0, %c0_i32 : i32, i32
  }
  func.func @transform_2(%arg0: i32) -> (i32, i32) {
    %c0_i32 = arith.constant 0 : i32
    %c0_i32_0 = arith.constant 0 : i32
    %c0_i32_1 = arith.constant 0 : i32
    return %c0_i32, %c0_i32_0 : i32, i32
  }
  func.func @transform_3(%arg0: i32) -> (i32, i32) {
    %c0_i32 = arith.constant 0 : i32
    %c0_i32_0 = arith.constant 0 : i32
    %c0_i32_1 = arith.constant 0 : i32
    return %c0_i32, %c0_i32_0 : i32, i32
  }
  func.func @transform_4(%arg0: i32) -> (i32, i32) {
    %c0_i32 = arith.constant 0 : i32
    %c0_i32_0 = arith.constant 0 : i32
    %c0_i32_1 = arith.constant 0 : i32
    return %c0_i32, %c0_i32_0 : i32, i32
  }
  func.func @transform_5(%arg0: i32) -> (i32, i32) {
    %c0_i32 = arith.constant 0 : i32
    %c0_i32_0 = arith.constant 0 : i32
    %c0_i32_1 = arith.constant 0 : i32
    return %c0_i32, %c0_i32_0 : i32, i32
  }
  func.func @transform_6(%arg0: i32) -> (i32, i32) {
    %c0_i32 = arith.constant 0 : i32
    %c0_i32_0 = arith.constant 0 : i32
    %c0_i32_1 = arith.constant 0 : i32
    return %c0_i32, %c0_i32_0 : i32, i32
  }
  func.func @transform_7(%arg0: i32) -> (i32, i32) {
    %c0_i32 = arith.constant 0 : i32
    %c0_i32_0 = arith.constant 0 : i32
    %c0_i32_1 = arith.constant 0 : i32
    return %c0_i32, %c0_i32_0 : i32, i32
  }
  func.func @transform_8(%arg0: i32) -> (i32, i32) {
    %c0_i32 = arith.constant 0 : i32
    %c0_i32_0 = arith.constant 0 : i32
    return %arg0, %c0_i32 : i32, i32
  }
}

</mosaic_0001>

<llo_original>
// kernel: tpu_custom_call.1
$region0: #{tpu_custom_call.1}
  #allocation0 [shape = 'u32[]', space=smem, size = 0x4, offset = 0x4, fixed_abs, tag = 'smem constant byte address 0x4 - core index']
  #allocation1 [shape = 'u32[144,128]{1,0:T(1,128)}', space=vmem, size = 0x12000, scoped, tag = 'internal scratch']
  %s0 = inlined_call_operand.vmem [shape: bf16[8,32], index: 0, kind: input, shape index: {}]
  %s1 = inlined_call_operand.vmem [shape: s32[8,1], index: 1, kind: input, shape index: {}]
  %s2 = inlined_call_operand.vmem [shape: bf16[32,64], index: 2, kind: input, shape index: {}]
  %s3 = inlined_call_operand.vmem [shape: f32[1,64], index: 3, kind: input, shape index: {}]
  %s4 = inlined_call_operand.vmem [shape: bf16[64,64], index: 4, kind: input, shape index: {}]
  %s5 = inlined_call_operand.vmem [shape: f32[1,64], index: 5, kind: input, shape index: {}]
  %s6 = inlined_call_operand.vmem [shape: bf16[64,12], index: 6, kind: input, shape index: {}]
  %s7 = inlined_call_operand.vmem [shape: f32[1,12], index: 7, kind: input, shape index: {}]
  %s8 = inlined_call_operand.vmem [shape: f32[8,4], index: 8, kind: output, shape index: {}]
  %s9 = sld [smem:[#allocation0]]
  $region42: #{tpu_custom_call.1} parent=0
    _
  %s11 = ssub.s32 1, %s9
  %s12 = scalar_select 0, %s11, %s9
  // Predicated region
  $region2: #{tpu_custom_call.1} parent=0 // pred_check
    _
  $region3: #{tpu_custom_call.1} parent=0 // pred_check_branch
    %14 = sbr.rel (0) target = $region5
  $region4: #{tpu_custom_call.1} parent=0 // pred_region
    _
  $region5: #{tpu_custom_call.1} parent=0 // pred_fallthru
    _
  // Predicated region
  $region6: #{tpu_custom_call.1} parent=0 // pred_check
    _
  $region7: #{tpu_custom_call.1} parent=0 // pred_check_branch
    %16 = sbr.rel (0) target = $region9
  $region8: #{tpu_custom_call.1} parent=0 // pred_region
    _
  $region9: #{tpu_custom_call.1} parent=0 // pred_fallthru
    _
  // Predicated region
  $region10: #{tpu_custom_call.1} parent=0 // pred_check
    _
  $region11: #{tpu_custom_call.1} parent=0 // pred_check_branch
    %18 = sbr.rel (0) target = $region13
  $region12: #{tpu_custom_call.1} parent=0 // pred_region
    _
  $region13: #{tpu_custom_call.1} parent=0 // pred_fallthru
    _
  // Predicated region
  $region14: #{tpu_custom_call.1} parent=0 // pred_check
    _
  $region15: #{tpu_custom_call.1} parent=0 // pred_check_branch
    %20 = sbr.rel (0) target = $region17
  $region16: #{tpu_custom_call.1} parent=0 // pred_region
    _
  $region17: #{tpu_custom_call.1} parent=0 // pred_fallthru
    _
  // Predicated region
  $region18: #{tpu_custom_call.1} parent=0 // pred_check
    _
  $region19: #{tpu_custom_call.1} parent=0 // pred_check_branch
    %22 = sbr.rel (0) target = $region21
  $region20: #{tpu_custom_call.1} parent=0 // pred_region
    _
  $region21: #{tpu_custom_call.1} parent=0 // pred_fallthru
    _
  // Predicated region
  $region22: #{tpu_custom_call.1} parent=0 // pred_check
    _
  $region23: #{tpu_custom_call.1} parent=0 // pred_check_branch
    %24 = sbr.rel (0) target = $region25
  $region24: #{tpu_custom_call.1} parent=0 // pred_region
    _
  $region25: #{tpu_custom_call.1} parent=0 // pred_fallthru
    _
  // Predicated region
  $region26: #{tpu_custom_call.1} parent=0 // pred_check
    _
  $region27: #{tpu_custom_call.1} parent=0 // pred_check_branch
    %26 = sbr.rel (0) target = $region29
  $region28: #{tpu_custom_call.1} parent=0 // pred_region
    _
  $region29: #{tpu_custom_call.1} parent=0 // pred_fallthru
    _
  // Predicated region
  $region30: #{tpu_custom_call.1} parent=0 // pred_check
    _
  $region31: #{tpu_custom_call.1} parent=0 // pred_check_branch
    %28 = sbr.rel (0) target = $region33
  $region32: #{tpu_custom_call.1} parent=0 // pred_region
    _
  $region33: #{tpu_custom_call.1} parent=0 // pred_fallthru
    _
  %v30 = vld [vmem:[%s0] sm:$0xf]
  %v31 = vld [vmem:[%s2] sm:$0xf]
  %v32 = vld [vmem:[%s2 + $0x4] sm:$0xf]
  %v33 = vld [vmem:[%s2 + $0x8] sm:$0xf]
  %v34 = vld [vmem:[%s2 + $0xc] sm:$0xf]
  %v35 = vld [vmem:[%s3] sm:$0x1]
  %v37 = vlaneseq
  %v38 = vshrl.u32 %v37, 7
  %v39 = vsub.s32 0, %v38
  %v40 = vrot.slane %v35, %v39
  %v46 = vunpack.c.l.b16 %v31
  %v47 = vunpack.c.l.b16 %v32
  %v48 = vunpack.c.l.b16 %v33
  %v49 = vunpack.c.l.b16 %v34
  %v50 = vpack.c.b16 %v47, %v46
  %v51 = vpack.c.b16 %v49, %v48
  %vm54 = vcmask 261120
  %v56 = vsel %vm54, %v30, 0
  %58 = vmatprep.subr.bf16.mxu0 0
  %59 = vmatpush1.bf16.msra.mxu0 %v50
  %60 = vmatprep.subr.bf16.mxu0 0
  %61 = vmatpush1.bf16.msra.mxu0 %v51
  %62 = vmatprep.subr.bf16.mxu0 0
  %63 = vmatpush1.bf16.msra.mxu0 0
  %64 = vmatprep.subr.bf16.mxu0 0
  %65 = vmatpush1.bf16.msra.mxu0 0
  %66 = vmatprep.subr.bf16.mxu0 0
  %67 = vmatpush1.bf16.msra.mxu0 0
  %68 = vmatprep.subr.bf16.mxu0 0
  %69 = vmatpush1.bf16.msra.mxu0 0
  %70 = vmatprep.subr.bf16.mxu0 0
  %71 = vmatpush1.bf16.msra.mxu0 0
  %72 = vmatprep.subr.bf16.mxu0 0
  %73 = vmatpush1.bf16.msra.mxu0 0
  %74 = vmatprep.subr.bf16.mxu0 0
  %75 = vmatpush1.bf16.msra.mxu0 0
  %76 = vmatprep.subr.bf16.mxu0 0
  %77 = vmatpush1.bf16.msra.mxu0 0
  %78 = vmatprep.subr.bf16.mxu0 0
  %79 = vmatpush1.bf16.msra.mxu0 0
  %80 = vmatprep.subr.bf16.mxu0 0
  %81 = vmatpush1.bf16.msra.mxu0 0
  %82 = vmatprep.subr.bf16.mxu0 0
  %83 = vmatpush1.bf16.msra.mxu0 0
  %84 = vmatprep.subr.bf16.mxu0 0
  %85 = vmatpush1.bf16.msra.mxu0 0
  %86 = vmatprep.subr.bf16.mxu0 0
  %87 = vmatpush1.bf16.msra.mxu0 0
  %88 = vmatprep.subr.bf16.mxu0 0
  %89 = vmatpush1.bf16.msra.mxu0 0
  %90 = vmatprep.mubr.bf16.mxu0 0
  %91 = vmatmul.mubr.bf16.gmra.mrb[0].mxu0 %v56
  %v92 = vpop.f32.mrb[0].mxu0
  %v93 = vadd.f32 %v40, %v92
  %v94 = vpop.f32.mrb[0].mxu0
  %v95 = vpop.f32.mrb[0].mxu0
  %v96 = vpop.f32.mrb[0].mxu0
  %97 = vdwg.mxu0
  %v98 = vmax.f32 %v93, 0.0
  %v99 = vpack.c.bf16 %v98, %v98
  %v100 = vld [vmem:[%s4] sm:$0xf]
  %v101 = vld [vmem:[%s4 + $0x4] sm:$0xf]
  %v102 = vld [vmem:[%s4 + $0x8] sm:$0xf]
  %v103 = vld [vmem:[%s4 + $0xc] sm:$0xf]
  %v104 = vld [vmem:[%s4 + $0x10] sm:$0xf]
  %v105 = vld [vmem:[%s4 + $0x14] sm:$0xf]
  %v106 = vld [vmem:[%s4 + $0x18] sm:$0xf]
  %v107 = vld [vmem:[%s4 + $0x1c] sm:$0xf]
  %v108 = vld [vmem:[%s5] sm:$0x1]
  %v110 = vlaneseq
  %v111 = vshrl.u32 %v110, 7
  %v112 = vsub.s32 0, %v111
  %v113 = vrot.slane %v108, %v112
  %v123 = vunpack.c.l.b16 %v100
  %v124 = vunpack.c.l.b16 %v101
  %v125 = vunpack.c.l.b16 %v102
  %v126 = vunpack.c.l.b16 %v103
  %v127 = vunpack.c.l.b16 %v104
  %v128 = vunpack.c.l.b16 %v105
  %v129 = vunpack.c.l.b16 %v106
  %v130 = vunpack.c.l.b16 %v107
  %v131 = vpack.c.b16 %v124, %v123
  %v132 = vpack.c.b16 %v126, %v125
  %v133 = vpack.c.b16 %v128, %v127
  %v134 = vpack.c.b16 %v130, %v129
  %vm139 = vcmask 523264
  %v141 = vsel %vm139, %v99, 0
  %143 = vmatprep.subr.bf16.mxu0 0
  %144 = vmatpush1.bf16.msra.mxu0 %v131
  %145 = vmatprep.subr.bf16.mxu0 0
  %146 = vmatpush1.bf16.msra.mxu0 %v132
  %147 = vmatprep.subr.bf16.mxu0 0
  %148 = vmatpush1.bf16.msra.mxu0 %v133
  %149 = vmatprep.subr.bf16.mxu0 0
  %150 = vmatpush1.bf16.msra.mxu0 %v134
  %151 = vmatprep.subr.bf16.mxu0 0
  %152 = vmatpush1.bf16.msra.mxu0 0
  %153 = vmatprep.subr.bf16.mxu0 0
  %154 = vmatpush1.bf16.msra.mxu0 0
  %155 = vmatprep.subr.bf16.mxu0 0
  %156 = vmatpush1.bf16.msra.mxu0 0
  %157 = vmatprep.subr.bf16.mxu0 0
  %158 = vmatpush1.bf16.msra.mxu0 0
  %159 = vmatprep.subr.bf16.mxu0 0
  %160 = vmatpush1.bf16.msra.mxu0 0
  %161 = vmatprep.subr.bf16.mxu0 0
  %162 = vmatpush1.bf16.msra.mxu0 0
  %163 = vmatprep.subr.bf16.mxu0 0
  %164 = vmatpush1.bf16.msra.mxu0 0
  %165 = vmatprep.subr.bf16.mxu0 0
  %166 = vmatpush1.bf16.msra.mxu0 0
  %167 = vmatprep.subr.bf16.mxu0 0
  %168 = vmatpush1.bf16.msra.mxu0 0
  %169 = vmatprep.subr.bf16.mxu0 0
  %170 = vmatpush1.bf16.msra.mxu0 0
  %171 = vmatprep.subr.bf16.mxu0 0
  %172 = vmatpush1.bf16.msra.mxu0 0
  %173 = vmatprep.subr.bf16.mxu0 0
  %174 = vmatpush1.bf16.msra.mxu0 0
  %175 = vmatprep.mubr.bf16.mxu0 0
  %176 = vmatmul.mubr.bf16.gmra.mrb[0].mxu0 %v141
  %v177 = vpop.f32.mrb[0].mxu0
  %v178 = vadd.f32 %v113, %v177
  %v179 = vpop.f32.mrb[0].mxu0
  %v180 = vpop.f32.mrb[0].mxu0
  %v181 = vpop.f32.mrb[0].mxu0
  %182 = vdwg.mxu0
  %v183 = vmax.f32 %v178, 0.0
  %v184 = vpack.c.bf16 %v183, %v183
  %v185 = vld [vmem:[%s6] sm:$0xf]
  %v186 = vld [vmem:[%s6 + $0x4] sm:$0xf]
  %v187 = vld [vmem:[%s6 + $0x8] sm:$0xf]
  %v188 = vld [vmem:[%s6 + $0xc] sm:$0xf]
  %v189 = vld [vmem:[%s6 + $0x10] sm:$0xf]
  %v190 = vld [vmem:[%s6 + $0x14] sm:$0xf]
  %v191 = vld [vmem:[%s6 + $0x18] sm:$0xf]
  %v192 = vld [vmem:[%s6 + $0x1c] sm:$0xf]
  %v193 = vld [vmem:[%s7] sm:$0x1]
  %v195 = vlaneseq
  %v196 = vshrl.u32 %v195, 7
  %v197 = vsub.s32 0, %v196
  %v198 = vrot.slane %v193, %v197
  %v208 = vunpack.c.l.b16 %v185
  %v209 = vunpack.c.l.b16 %v186
  %v210 = vunpack.c.l.b16 %v187
  %v211 = vunpack.c.l.b16 %v188
  %v212 = vunpack.c.l.b16 %v189
  %v213 = vunpack.c.l.b16 %v190
  %v214 = vunpack.c.l.b16 %v191
  %v215 = vunpack.c.l.b16 %v192
  %v216 = vpack.c.b16 %v209, %v208
  %v217 = vpack.c.b16 %v211, %v210
  %v218 = vpack.c.b16 %v213, %v212
  %v219 = vpack.c.b16 %v215, %v214
  %v225 = vsel %vm139, %v184, 0
  %227 = vmatprep.subr.bf16.mxu0 0
  %228 = vmatpush1.bf16.msra.mxu0 %v216
  %229 = vmatprep.subr.bf16.mxu0 0
  %230 = vmatpush1.bf16.msra.mxu0 %v217
  %231 = vmatprep.subr.bf16.mxu0 0
  %232 = vmatpush1.bf16.msra.mxu0 %v218
  %233 = vmatprep.subr.bf16.mxu0 0
  %234 = vmatpush1.bf16.msra.mxu0 %v219
  %235 = vmatprep.subr.bf16.mxu0 0
  %236 = vmatpush1.bf16.msra.mxu0 0
  %237 = vmatprep.subr.bf16.mxu0 0
  %238 = vmatpush1.bf16.msra.mxu0 0
  %239 = vmatprep.subr.bf16.mxu0 0
  %240 = vmatpush1.bf16.msra.mxu0 0
  %241 = vmatprep.subr.bf16.mxu0 0
  %242 = vmatpush1.bf16.msra.mxu0 0
  %243 = vmatprep.subr.bf16.mxu0 0
  %244 = vmatpush1.bf16.msra.mxu0 0
  %245 = vmatprep.subr.bf16.mxu0 0
  %246 = vmatpush1.bf16.msra.mxu0 0
  %247 = vmatprep.subr.bf16.mxu0 0
  %248 = vmatpush1.bf16.msra.mxu0 0
  %249 = vmatprep.subr.bf16.mxu0 0
  %250 = vmatpush1.bf16.msra.mxu0 0
  %251 = vmatprep.subr.bf16.mxu0 0
  %252 = vmatpush1.bf16.msra.mxu0 0
  %253 = vmatprep.subr.bf16.mxu0 0
  %254 = vmatpush1.bf16.msra.mxu0 0
  %255 = vmatprep.subr.bf16.mxu0 0
  %256 = vmatpush1.bf16.msra.mxu0 0
  %257 = vmatprep.subr.bf16.mxu0 0
  %258 = vmatpush1.bf16.msra.mxu0 0
  %259 = vmatprep.mubr.bf16.mxu0 0
  %260 = vmatmul.mubr.bf16.gmra.mrb[0].mxu0 %v225
  %v261 = vpop.f32.mrb[0].mxu0
  %v262 = vadd.f32 %v198, %v261
  %v263 = vpop.f32.mrb[0].mxu0
  %v264 = vpop.f32.mrb[0].mxu0
  %v265 = vpop.f32.mrb[0].mxu0
  %266 = vdwg.mxu0
  %v267 = vld [vmem:[%s1] sm:$0xff]
  %vm268 = vcmp.eq.s32.totalorder %v267, 0
  %vm269 = vcmp.eq.s32.totalorder %v267, 1
  %v270 = vsel %vm269, 1, 0
  %271 = vset.pattern.permute.xlu0 0
  %272 = vperm.xlu0 %271, %v270
  %v273 = vpop.permute.xlu0 %272
  %vm274 = vcmp.eq.s32.totalorder %v273, 1
  %276 = vrot.lane.b32.xlu0 %v262, 124
  %v277 = vpop.permute.xlu0 %276
  %v279 = vsel %vm274, %v262, %v277
  %v280 = vsel %vm268, 1, 0
  %281 = vset.pattern.permute.xlu0 0
  %282 = vperm.xlu0 %281, %v280
  %v283 = vpop.permute.xlu0 %282
  %vm284 = vcmp.eq.s32.totalorder %v283, 1
  %286 = vrot.lane.b32.xlu0 %v279, 124
  %v287 = vpop.permute.xlu0 %286
  %v289 = vsel %vm284, %v262, %v287
  %v290 = vmax.f32 %v289, -20.0
  %v291 = vmin.f32 %v290, 2.0
  %v292 = vmul.f32 %v291, 1.442695
  %v293 = vpow.pop %v292
  %vm294 = vcmask 15360
  %v295 = vsel %vm294, %v289, %v293
  %vm296 = vcmask 31744
  %297 = vst.msk [vmem:[%s8] sm:$0xff] %vm296, %v295
  // Predicated region
  $region34: #{tpu_custom_call.1} parent=0 // pred_check
    _
  $region35: #{tpu_custom_call.1} parent=0 // pred_check_branch
    %299 = sbr.rel (0) target = $region37
  $region36: #{tpu_custom_call.1} parent=0 // pred_region
    _
  $region37: #{tpu_custom_call.1} parent=0 // pred_fallthru
    _
  // Predicated region
  $region38: #{tpu_custom_call.1} parent=0 // pred_check
    _
  $region39: #{tpu_custom_call.1} parent=0 // pred_check_branch
    %301 = sbr.rel (0) target = $region41
  $region40: #{tpu_custom_call.1} parent=0 // pred_region
    _
  $region41: #{tpu_custom_call.1} parent=0 // pred_fallthru
    _

</llo_original>
